<compile_context>
chip_gen: v6e
topology: v6e:2x2x1
jax: 0.10.0
libtpu: 0.0.40
codegen_flags: <defaults>
</compile_context>

<pallas_src>
import functools

import jax
import jax.numpy as jnp
from jax.experimental import pallas as pl
from jax.experimental.pallas import tpu as pltpu


def _round_up(x, m):
    return (x + m - 1) // m * m


def _cdiv(a, b):
    return (a + b - 1) // b


def _make_jk_head_kernel(n_terms):
    """Kernel over one tile of nodes: sum_l h_l @ Wc[l] -> +b, ReLU -> @W2 +b2."""

    def kernel(*refs):
        h_refs = refs[:n_terms]
        wc_ref, bc_ref, w2_ref, b2_ref, o_ref = refs[n_terms:]

        # Fused (cat-JK Linear) o (Linear D->D): accumulate L small matmuls
        # (static Python loop; equivalent to one K = L*D matmul on the MXU,
        # but avoids materializing the concatenated activation in HBM).
        acc = jnp.dot(h_refs[0][...], wc_ref[0],
                      preferred_element_type=jnp.float32)
        for l in range(1, n_terms):
            acc = acc + jnp.dot(h_refs[l][...], wc_ref[l],
                                preferred_element_type=jnp.float32)
        h1 = jnp.maximum(acc + bc_ref[...], 0.0)

        # Final Linear(D -> dim_out), no activation.  Keep the f32 activation;
        # up-cast the tiny W2 instead of down-casting h1.
        out = jnp.dot(h1, w2_ref[...].astype(jnp.float32),
                      preferred_element_type=jnp.float32)
        o_ref[...] = (out + b2_ref[...]).astype(o_ref.dtype)

    return kernel


@functools.partial(jax.jit, static_argnames=("tile_n",))
def gnn_inductive_node_head_jk(h_list, batch_x, wjk, bjk, w1, b1, w2, b2, *,
                               tile_n=8192):
    """JK('cat') head forward.

    h_list:  list of layers_mp message-passing outputs, each [N, D]
    batch_x: [N, D]  (final node features)
    wjk: [L*D, D], bjk: [D]      -- JumpingKnowledge Linear  (L = layers_mp)
    w1:  [D, D],   b1:  [D]      -- post-MP hidden Linear (+ReLU)
    w2:  [D, Dout], b2: [Dout]   -- post-MP final Linear (no act)
    Returns pred [N, Dout] (float32).
    """
    # JK term list exactly as in forward(): h[1:] + [batch.x].
    jk_terms = list(h_list)[1:] + [batch_x]
    L = len(jk_terms)
    N, D = jk_terms[0].shape
    dim_out = w2.shape[1]
    x_dtype = jnp.result_type(*[t.dtype for t in jk_terms])

    # Algebraic fusion of the two back-to-back Linears (no nonlinearity
    # between them): W_comb = Wjk @ W1, b_comb = bjk @ W1 + b1 (computed in
    # f32, then W_comb cast once to the activation dtype for the MXU).
    hp = jax.lax.Precision.HIGHEST
    w_comb = jnp.dot(wjk.astype(jnp.float32), w1.astype(jnp.float32),
                     precision=hp)                                    # [L*D, D]
    b_comb = (jnp.dot(bjk.astype(jnp.float32)[None, :],
                      w1.astype(jnp.float32), precision=hp)
              + b1.astype(jnp.float32)[None, :])                      # [1, D]
    w_comb = w_comb.reshape(L, D, D).astype(x_dtype)                  # [L, D, D]
    b2_in = b2.astype(jnp.float32)[None, :]                           # [1, Dout]

    # Node tiling: large tiles amortize the ~0.35us/grid-step overhead, but
    # cap at ceil(N/2) so there are >= 2 grid steps when possible (v7x has
    # two TensorCores to feed through the "parallel" dimension).
    tile_n = max(8, _round_up(int(tile_n), 8))
    half = _round_up(max(_cdiv(N, 2), 8), 8)
    tile = min(tile_n, half)
    grid = (_cdiv(N, tile),)

    # Explicit VMEM budget: double-buffered input/output tiles + weights +
    # slack; keeps us well under v7x's 64 MiB physical VMEM.
    in_bytes = jnp.dtype(x_dtype).itemsize
    step_bytes = L * tile * D * in_bytes + tile * dim_out * 4
    weight_bytes = (L * D * D * in_bytes
                    + D * dim_out * jnp.dtype(w2.dtype).itemsize
                    + (D + dim_out) * 4)
    vmem_limit = int(min(60 << 20,
                         max(24 << 20, 2 * step_bytes + weight_bytes + (4 << 20))))

    kernel = _make_jk_head_kernel(L)
    in_specs = (
        [pl.BlockSpec((tile, D), lambda i: (i, 0)) for _ in range(L)]   # JK terms
        + [pl.BlockSpec((L, D, D), lambda i: (0, 0, 0)),                # W_comb (split)
           pl.BlockSpec((1, D), lambda i: (0, 0)),                      # b_comb
           pl.BlockSpec((D, dim_out), lambda i: (0, 0)),                # W2
           pl.BlockSpec((1, dim_out), lambda i: (0, 0))])               # b2

    pred = pl.pallas_call(
        kernel,
        out_shape=jax.ShapeDtypeStruct((N, dim_out), jnp.float32),
        grid=grid,
        in_specs=in_specs,
        out_specs=pl.BlockSpec((tile, dim_out), lambda i: (i, 0)),
        compiler_params=pltpu.CompilerParams(
            dimension_semantics=("parallel",),
            vmem_limit_bytes=vmem_limit),
    )(*jk_terms, w_comb, b_comb, w2, b2_in)

    return pred


def _reference(h_list, batch_x, wjk, bjk, w1, b1, w2, b2):
    """Unfused pure-JAX reference mirroring the PyTorch module."""
    hp = jax.lax.Precision.HIGHEST
    cat = jnp.concatenate(
        [t.astype(jnp.float32) for t in list(h_list)[1:]]
        + [batch_x.astype(jnp.float32)], axis=-1)
    h = jnp.dot(cat, wjk, precision=hp) + bjk
    h = jnp.maximum(jnp.dot(h, w1, precision=hp) + b1, 0.0)
    return jnp.dot(h, w2, precision=hp) + b2


if __name__ == "__main__":
    # Small config consistent with the module:
    #   cfg.gnn.head = 'inductive_node_cat_jk', cfg.gnn.layers_mp = 4,
    #   cfg.gnn.layers_post_mp = 2, dim_in = 32, dim_out = 8.
    layers_mp = 4            # n_agg_terms = 4  (h[1:] gives 3 terms + batch.x)
    N, D, dim_out = 128, 32, 8

    key = jax.random.PRNGKey(0)
    keys = jax.random.split(key, 12)

    # Synthetic message-passing outputs h[0..layers_mp-1], batch.x, batch.y.
    h_list = [jax.random.normal(keys[i], (N, D), jnp.float32)
              for i in range(layers_mp)]
    batch_x = jax.random.normal(keys[4], (N, D), jnp.float32)
    batch_y = jax.random.randint(keys[5], (N,), 0, dim_out)

    L = layers_mp  # number of JK terms: len(h[1:]) + 1

    def init(k, shape, fan_in):
        return (jax.random.uniform(k, shape, jnp.float32, -1.0, 1.0)
                / jnp.sqrt(jnp.float32(fan_in)))

    # Parameters with module shapes: JK Linear [L*D, D]+[D]; MLP: [D,D]+[D],
    # [D,dim_out]+[dim_out].
    wjk = init(keys[6], (L * D, D), L * D)
    bjk = init(keys[7], (D,), L * D)
    w1 = init(keys[8], (D, D), D)
    b1 = init(keys[9], (D,), D)
    w2 = init(keys[10], (D, dim_out), D)
    b2 = init(keys[11], (dim_out,), D)

    ref = _reference(h_list, batch_x, wjk, bjk, w1, b1, w2, b2)

    # float32 path.
    pred = gnn_inductive_node_head_jk(h_list, batch_x, wjk, bjk, w1, b1, w2, b2)
    pred = jax.block_until_ready(pred)
    label = batch_y          # _apply_index: (batch.x, batch.y) -> (pred, label)
    assert pred.shape == (N, dim_out)
    assert label.shape == (N,)
    assert jnp.allclose(pred, ref, atol=1e-3, rtol=1e-3)

    # bf16 path: only when the upstream producer already stores activations as
    # bf16 in HBM (no wrapper-side cast pass); f32 accumulation / f32 output.
    h_list_bf = [t.astype(jnp.bfloat16) for t in h_list]
    x_bf = batch_x.astype(jnp.bfloat16)
    pred_bf16 = gnn_inductive_node_head_jk(h_list_bf, x_bf, wjk, bjk, w1, b1,
                                           w2, b2)
    pred_bf16 = jax.block_until_ready(pred_bf16)
    assert pred_bf16.shape == (N, dim_out)
    assert float(jnp.max(jnp.abs(pred_bf16 - ref))) < 5e-2

    print("KERNEL_OK")
</pallas_src>

<mosaic_0001>
module attributes {stable_mosaic.version = 11 : i64} {
  func.func @kernel(%arg0: i32, %arg1: memref<64x32xf32, #tpu.memory_space<vmem>>, %arg2: memref<64x32xf32, #tpu.memory_space<vmem>>, %arg3: memref<64x32xf32, #tpu.memory_space<vmem>>, %arg4: memref<64x32xf32, #tpu.memory_space<vmem>>, %arg5: memref<4x32x32xf32, #tpu.memory_space<vmem>>, %arg6: memref<1x32xf32, #tpu.memory_space<vmem>>, %arg7: memref<32x8xf32, #tpu.memory_space<vmem>>, %arg8: memref<1x8xf32, #tpu.memory_space<vmem>>, %arg9: memref<64x8xf32, #tpu.memory_space<vmem>>) attributes {dimension_semantics = [#tpu.dimension_semantics<parallel>], iteration_bounds = array<i64: 2>, scalar_prefetch = 0 : i64, scratch_operands = 0 : i64, tpu.core_type = #tpu.core_type<tc>, window_params = [{transform_indices = @transform_0, window_bounds = array<i64: 64, 32>}, {transform_indices = @transform_1, window_bounds = array<i64: 64, 32>}, {transform_indices = @transform_2, window_bounds = array<i64: 64, 32>}, {transform_indices = @transform_3, window_bounds = array<i64: 64, 32>}, {pipeline_mode = #tpu.pipeline_mode<synchronous>, transform_indices = @transform_4, window_bounds = array<i64: 4, 32, 32>}, {pipeline_mode = #tpu.pipeline_mode<synchronous>, transform_indices = @transform_5, window_bounds = array<i64: 1, 32>}, {pipeline_mode = #tpu.pipeline_mode<synchronous>, transform_indices = @transform_6, window_bounds = array<i64: 32, 8>}, {pipeline_mode = #tpu.pipeline_mode<synchronous>, transform_indices = @transform_7, window_bounds = array<i64: 1, 8>}, {transform_indices = @transform_8, window_bounds = array<i64: 64, 8>}]} {
    %c0 = arith.constant 0 : index
    %c0_0 = arith.constant 0 : index
    %0 = vector.load %arg1[%c0, %c0_0] : memref<64x32xf32, #tpu.memory_space<vmem>>, vector<64x32xf32>
    %c0_1 = arith.constant 0 : index
    %c0_2 = arith.constant 0 : index
    %c0_3 = arith.constant 0 : index
    %1 = vector.load %arg5[%c0_1, %c0_2, %c0_3] : memref<4x32x32xf32, #tpu.memory_space<vmem>>, vector<1x32x32xf32>
    %2 = vector.shape_cast %1 : vector<1x32x32xf32> to vector<32x32xf32>
    %cst = arith.constant dense<0.000000e+00> : vector<64x32xf32>
    %3 = tpu.matmul %0, %2, %cst {dimension_numbers = #tpu.dot_dimension_numbers<[1], [0], [0], [1], [0, 0, 1, 1], [], []>} : vector<64x32xf32>, vector<32x32xf32>, vector<64x32xf32> -> vector<64x32xf32>
    %c0_4 = arith.constant 0 : index
    %c0_5 = arith.constant 0 : index
    %4 = vector.load %arg2[%c0_4, %c0_5] : memref<64x32xf32, #tpu.memory_space<vmem>>, vector<64x32xf32>
    %c1 = arith.constant 1 : index
    %c0_6 = arith.constant 0 : index
    %c0_7 = arith.constant 0 : index
    %5 = vector.load %arg5[%c1, %c0_6, %c0_7] : memref<4x32x32xf32, #tpu.memory_space<vmem>>, vector<1x32x32xf32>
    %6 = vector.shape_cast %5 : vector<1x32x32xf32> to vector<32x32xf32>
    %cst_8 = arith.constant dense<0.000000e+00> : vector<64x32xf32>
    %7 = tpu.matmul %4, %6, %cst_8 {dimension_numbers = #tpu.dot_dimension_numbers<[1], [0], [0], [1], [0, 0, 1, 1], [], []>} : vector<64x32xf32>, vector<32x32xf32>, vector<64x32xf32> -> vector<64x32xf32>
    %8 = arith.addf %3, %7 : vector<64x32xf32>
    %c0_9 = arith.constant 0 : index
    %c0_10 = arith.constant 0 : index
    %9 = vector.load %arg3[%c0_9, %c0_10] : memref<64x32xf32, #tpu.memory_space<vmem>>, vector<64x32xf32>
    %c2 = arith.constant 2 : index
    %c0_11 = arith.constant 0 : index
    %c0_12 = arith.constant 0 : index
    %10 = vector.load %arg5[%c2, %c0_11, %c0_12] : memref<4x32x32xf32, #tpu.memory_space<vmem>>, vector<1x32x32xf32>
    %11 = vector.shape_cast %10 : vector<1x32x32xf32> to vector<32x32xf32>
    %cst_13 = arith.constant dense<0.000000e+00> : vector<64x32xf32>
    %12 = tpu.matmul %9, %11, %cst_13 {dimension_numbers = #tpu.dot_dimension_numbers<[1], [0], [0], [1], [0, 0, 1, 1], [], []>} : vector<64x32xf32>, vector<32x32xf32>, vector<64x32xf32> -> vector<64x32xf32>
    %13 = arith.addf %8, %12 : vector<64x32xf32>
    %c0_14 = arith.constant 0 : index
    %c0_15 = arith.constant 0 : index
    %14 = vector.load %arg4[%c0_14, %c0_15] : memref<64x32xf32, #tpu.memory_space<vmem>>, vector<64x32xf32>
    %c3 = arith.constant 3 : index
    %c0_16 = arith.constant 0 : index
    %c0_17 = arith.constant 0 : index
    %15 = vector.load %arg5[%c3, %c0_16, %c0_17] : memref<4x32x32xf32, #tpu.memory_space<vmem>>, vector<1x32x32xf32>
    %16 = vector.shape_cast %15 : vector<1x32x32xf32> to vector<32x32xf32>
    %cst_18 = arith.constant dense<0.000000e+00> : vector<64x32xf32>
    %17 = tpu.matmul %14, %16, %cst_18 {dimension_numbers = #tpu.dot_dimension_numbers<[1], [0], [0], [1], [0, 0, 1, 1], [], []>} : vector<64x32xf32>, vector<32x32xf32>, vector<64x32xf32> -> vector<64x32xf32>
    %18 = arith.addf %13, %17 : vector<64x32xf32>
    %c0_19 = arith.constant 0 : index
    %c0_20 = arith.constant 0 : index
    %19 = vector.load %arg6[%c0_19, %c0_20] : memref<1x32xf32, #tpu.memory_space<vmem>>, vector<1x32xf32>
    %20 = vector.broadcast %19 : vector<1x32xf32> to vector<64x32xf32>
    %21 = arith.addf %18, %20 : vector<64x32xf32>
    %cst_21 = arith.constant 0.000000e+00 : f32
    %22 = vector.broadcast %cst_21 : f32 to vector<64x32xf32>
    %23 = arith.maximumf %21, %22 : vector<64x32xf32>
    %c0_22 = arith.constant 0 : index
    %c0_23 = arith.constant 0 : index
    %24 = vector.load %arg7[%c0_22, %c0_23] : memref<32x8xf32, #tpu.memory_space<vmem>>, vector<32x8xf32>
    %cst_24 = arith.constant dense<0.000000e+00> : vector<64x8xf32>
    %25 = tpu.matmul %23, %24, %cst_24 {dimension_numbers = #tpu.dot_dimension_numbers<[1], [0], [0], [1], [0, 0, 1, 1], [], []>} : vector<64x32xf32>, vector<32x8xf32>, vector<64x8xf32> -> vector<64x8xf32>
    %c0_25 = arith.constant 0 : index
    %c0_26 = arith.constant 0 : index
    %26 = vector.load %arg8[%c0_25, %c0_26] : memref<1x8xf32, #tpu.memory_space<vmem>>, vector<1x8xf32>
    %27 = vector.broadcast %26 : vector<1x8xf32> to vector<64x8xf32>
    %28 = arith.addf %25, %27 : vector<64x8xf32>
    %c0_27 = arith.constant 0 : index
    %c0_28 = arith.constant 0 : index
    %29 = vector.load %arg9[%c0_27, %c0_28] : memref<64x8xf32, #tpu.memory_space<vmem>>, vector<64x8xf32>
    tpu.vector_store %arg9[%c0_27, %c0_28], %28 {strides = array<i32>} : memref<64x8xf32, #tpu.memory_space<vmem>>, vector<64x8xf32>,
    return
  }
  func.func @transform_0(%arg0: i32) -> (i32, i32) {
    %c0_i32 = arith.constant 0 : i32
    %c0_i32_0 = arith.constant 0 : i32
    return %arg0, %c0_i32 : i32, i32
  }
  func.func @transform_1(%arg0: i32) -> (i32, i32) {
    %c0_i32 = arith.constant 0 : i32
    %c0_i32_0 = arith.constant 0 : i32
    return %arg0, %c0_i32 : i32, i32
  }
  func.func @transform_2(%arg0: i32) -> (i32, i32) {
    %c0_i32 = arith.constant 0 : i32
    %c0_i32_0 = arith.constant 0 : i32
    return %arg0, %c0_i32 : i32, i32
  }
  func.func @transform_3(%arg0: i32) -> (i32, i32) {
    %c0_i32 = arith.constant 0 : i32
    %c0_i32_0 = arith.constant 0 : i32
    return %arg0, %c0_i32 : i32, i32
  }
  func.func @transform_4(%arg0: i32) -> (i32, i32, i32) {
    %c0_i32 = arith.constant 0 : i32
    %c0_i32_0 = arith.constant 0 : i32
    %c0_i32_1 = arith.constant 0 : i32
    %c0_i32_2 = arith.constant 0 : i32
    return %c0_i32, %c0_i32_0, %c0_i32_1 : i32, i32, i32
  }
  func.func @transform_5(%arg0: i32) -> (i32, i32) {
    %c0_i32 = arith.constant 0 : i32
    %c0_i32_0 = arith.constant 0 : i32
    %c0_i32_1 = arith.constant 0 : i32
    return %c0_i32, %c0_i32_0 : i32, i32
  }
  func.func @transform_6(%arg0: i32) -> (i32, i32) {
    %c0_i32 = arith.constant 0 : i32
    %c0_i32_0 = arith.constant 0 : i32
    %c0_i32_1 = arith.constant 0 : i32
    return %c0_i32, %c0_i32_0 : i32, i32
  }
  func.func @transform_7(%arg0: i32) -> (i32, i32) {
    %c0_i32 = arith.constant 0 : i32
    %c0_i32_0 = arith.constant 0 : i32
    %c0_i32_1 = arith.constant 0 : i32
    return %c0_i32, %c0_i32_0 : i32, i32
  }
  func.func @transform_8(%arg0: i32) -> (i32, i32) {
    %c0_i32 = arith.constant 0 : i32
    %c0_i32_0 = arith.constant 0 : i32
    return %arg0, %c0_i32 : i32, i32
  }
}

</mosaic_0001>

<llo_original>
// kernel: gnn_inductive_node_head_jk.1
$region0: #{gnn_inductive_node_head_jk.1}
  #allocation0 [shape = 'u32[]', space=smem, size = 0x4, offset = 0x4, fixed_abs, tag = 'smem constant byte address 0x4 - core index']
  #allocation1 [shape = 'u32[144,128]{1,0:T(1,128)}', space=vmem, size = 0x12000, scoped, tag = 'internal scratch']
  %s0 = inlined_call_operand.vmem [shape: f32[128,32], index: 0, kind: input, shape index: {}]
  %s1 = inlined_call_operand.vmem [shape: f32[128,32], index: 1, kind: input, shape index: {}]
  %s2 = inlined_call_operand.vmem [shape: f32[128,32], index: 2, kind: input, shape index: {}]
  %s3 = inlined_call_operand.vmem [shape: f32[128,32], index: 3, kind: input, shape index: {}]
  %s4 = inlined_call_operand.vmem [shape: f32[4,32,32], index: 4, kind: input, shape index: {}]
  %s5 = inlined_call_operand.vmem [shape: f32[1,32], index: 5, kind: input, shape index: {}]
  %s6 = inlined_call_operand.vmem [shape: f32[32,8], index: 6, kind: input, shape index: {}]
  %s7 = inlined_call_operand.vmem [shape: f32[1,8], index: 7, kind: input, shape index: {}]
  %s8 = inlined_call_operand.vmem [shape: f32[128,8], index: 8, kind: output, shape index: {}]
  %s9 = sld [smem:[#allocation0]]
  $region65: #{gnn_inductive_node_head_jk.1} parent=0
    _
  %s11 = ssub.s32 1, %s9
  %s12 = scalar_select 0, %s11, %s9
  loop: start=0, step=1, limit=4
  $region2: #{gnn_inductive_node_head_jk.1} parent=0 // loop_pre_header
    _
  $region3: #{gnn_inductive_node_head_jk.1} parent=0 // loop_header
    %s14 = sphi 0, %s18
    %p15 = scmp.ge.s32.totalorder %s14, 4
    %s24 = sphi 0, %s26
    %s27 = sphi 0, %s24
    %s28 = sphi 0, %s27
    %s44 = sphi 0, %s28
    %s50 = sphi 0, %s52
    %s53 = sphi 0, %s50
    %s54 = sphi 0, %s53
    %s70 = sphi 0, %s54
    %s76 = sphi 0, %s78
    %s79 = sphi 0, %s76
    %s80 = sphi 0, %s79
    %s96 = sphi 0, %s80
    %s102 = sphi 0, %s104
    %s105 = sphi 0, %s102
    %s106 = sphi 0, %s105
    %s122 = sphi 0, %s106
    %s126 = sphi 0, %s126
    %s128 = sphi 0, %s126
    %s129 = sphi 0, %s128
    %s143 = sphi 0, %s129
    %s147 = sphi 0, %s147
    %s149 = sphi 0, %s147
    %s150 = sphi 0, %s149
    %s164 = sphi 0, %s150
    %s168 = sphi 0, %s168
    %s170 = sphi 0, %s168
    %s171 = sphi 0, %s170
    %s185 = sphi 0, %s171
    %s189 = sphi 0, %s189
    %s191 = sphi 0, %s189
    %s192 = sphi 0, %s191
    %s206 = sphi 0, %s192
    %s212 = sphi 0, %s214
    %s215 = sphi 0, %s212
    %s216 = sphi 0, %s215
    %s232 = sphi 0, %s216
  $region4: #{gnn_inductive_node_head_jk.1} parent=0 // loop_header_branch
    %17 = sbr.rel (%p15) target = $region8
  $region5: #{gnn_inductive_node_head_jk.1} parent=0 // loop_body
    %s19 = ssub.s32 %s14, 1
    %s20 = ssub.s32 %s14, 2
    %s21 = sadd.s32 %s14, 1
    %s22 = ssub.s32 %s14, %s21
    %p23 = scmp.eq.s32.totalorder %s22, 0
    %s25 = sadd.s32 %s24, 1
    %s26 = scalar_select %p23, %s24, %s25
    %p29 = pneg %p23
    %p30 = scmp.eq.s32.totalorder %s14, 1
    %p31 = por %p29, %p30
    %p32 = scmp.ne.s32.totalorder %s24, %s27
    %p33 = scmp.eq.s32.totalorder %s14, 0
    %p34 = por %p32, %p33
    %p35 = scmp.ne.s32.totalorder %s24, %s27
    %p36 = scmp.eq.s32.totalorder %s19, 1
    %p37 = por %p35, %p36
    %p38 = scmp.ne.s32.totalorder %s27, %s28
    %p39 = scmp.eq.s32.totalorder %s19, 0
    %p40 = por %p38, %p39
    %p41 = scmp.ne.s32.totalorder %s27, %s28
    %p42 = scmp.eq.s32.totalorder %s20, 1
    %p43 = por %p41, %p42
    %p45 = scmp.ne.s32.totalorder %s28, %s44
    %p46 = scmp.eq.s32.totalorder %s20, 0
    %p47 = por %p45, %p46
    %s48 = ssub.s32 %s14, %s21
    %p49 = scmp.eq.s32.totalorder %s48, 0
    %s51 = sadd.s32 %s50, 1
    %s52 = scalar_select %p49, %s50, %s51
    %p55 = pneg %p49
    %p56 = scmp.eq.s32.totalorder %s14, 1
    %p57 = por %p55, %p56
    %p58 = scmp.ne.s32.totalorder %s50, %s53
    %p59 = scmp.eq.s32.totalorder %s14, 0
    %p60 = por %p58, %p59
    %p61 = scmp.ne.s32.totalorder %s50, %s53
    %p62 = scmp.eq.s32.totalorder %s19, 1
    %p63 = por %p61, %p62
    %p64 = scmp.ne.s32.totalorder %s53, %s54
    %p65 = scmp.eq.s32.totalorder %s19, 0
    %p66 = por %p64, %p65
    %p67 = scmp.ne.s32.totalorder %s53, %s54
    %p68 = scmp.eq.s32.totalorder %s20, 1
    %p69 = por %p67, %p68
    %p71 = scmp.ne.s32.totalorder %s54, %s70
    %p72 = scmp.eq.s32.totalorder %s20, 0
    %p73 = por %p71, %p72
    %s74 = ssub.s32 %s14, %s21
    %p75 = scmp.eq.s32.totalorder %s74, 0
    %s77 = sadd.s32 %s76, 1
    %s78 = scalar_select %p75, %s76, %s77
    %p81 = pneg %p75
    %p82 = scmp.eq.s32.totalorder %s14, 1
    %p83 = por %p81, %p82
    %p84 = scmp.ne.s32.totalorder %s76, %s79
    %p85 = scmp.eq.s32.totalorder %s14, 0
    %p86 = por %p84, %p85
    %p87 = scmp.ne.s32.totalorder %s76, %s79
    %p88 = scmp.eq.s32.totalorder %s19, 1
    %p89 = por %p87, %p88
    %p90 = scmp.ne.s32.totalorder %s79, %s80
    %p91 = scmp.eq.s32.totalorder %s19, 0
    %p92 = por %p90, %p91
    %p93 = scmp.ne.s32.totalorder %s79, %s80
    %p94 = scmp.eq.s32.totalorder %s20, 1
    %p95 = por %p93, %p94
    %p97 = scmp.ne.s32.totalorder %s80, %s96
    %p98 = scmp.eq.s32.totalorder %s20, 0
    %p99 = por %p97, %p98
    %s100 = ssub.s32 %s14, %s21
    %p101 = scmp.eq.s32.totalorder %s100, 0
    %s103 = sadd.s32 %s102, 1
    %s104 = scalar_select %p101, %s102, %s103
    %p107 = pneg %p101
    %p108 = scmp.eq.s32.totalorder %s14, 1
    %p109 = por %p107, %p108
    %p110 = scmp.ne.s32.totalorder %s102, %s105
    %p111 = scmp.eq.s32.totalorder %s14, 0
    %p112 = por %p110, %p111
    %p113 = scmp.ne.s32.totalorder %s102, %s105
    %p114 = scmp.eq.s32.totalorder %s19, 1
    %p115 = por %p113, %p114
    %p116 = scmp.ne.s32.totalorder %s105, %s106
    %p117 = scmp.eq.s32.totalorder %s19, 0
    %p118 = por %p116, %p117
    %p119 = scmp.ne.s32.totalorder %s105, %s106
    %p120 = scmp.eq.s32.totalorder %s20, 1
    %p121 = por %p119, %p120
    %p123 = scmp.ne.s32.totalorder %s106, %s122
    %p124 = scmp.eq.s32.totalorder %s20, 0
    %p125 = por %p123, %p124
    %s127 = sadd.s32 %s126, 1
    %p130 = scmp.eq.s32.totalorder %s14, 1
    %p131 = scmp.ne.s32.totalorder %s126, %s128
    %p132 = scmp.eq.s32.totalorder %s14, 0
    %p133 = por %p131, %p132
    %p134 = scmp.ne.s32.totalorder %s126, %s128
    %p135 = scmp.eq.s32.totalorder %s19, 1
    %p136 = por %p134, %p135
    %p137 = scmp.ne.s32.totalorder %s128, %s129
    %p138 = scmp.eq.s32.totalorder %s19, 0
    %p139 = por %p137, %p138
    %p140 = scmp.ne.s32.totalorder %s128, %s129
    %p141 = scmp.eq.s32.totalorder %s20, 1
    %p142 = por %p140, %p141
    %p144 = scmp.ne.s32.totalorder %s129, %s143
    %p145 = scmp.eq.s32.totalorder %s20, 0
    %p146 = por %p144, %p145
    %s148 = sadd.s32 %s147, 1
    %p151 = scmp.eq.s32.totalorder %s14, 1
    %p152 = scmp.ne.s32.totalorder %s147, %s149
    %p153 = scmp.eq.s32.totalorder %s14, 0
    %p154 = por %p152, %p153
    %p155 = scmp.ne.s32.totalorder %s147, %s149
    %p156 = scmp.eq.s32.totalorder %s19, 1
    %p157 = por %p155, %p156
    %p158 = scmp.ne.s32.totalorder %s149, %s150
    %p159 = scmp.eq.s32.totalorder %s19, 0
    %p160 = por %p158, %p159
    %p161 = scmp.ne.s32.totalorder %s149, %s150
    %p162 = scmp.eq.s32.totalorder %s20, 1
    %p163 = por %p161, %p162
    %p165 = scmp.ne.s32.totalorder %s150, %s164
    %p166 = scmp.eq.s32.totalorder %s20, 0
    %p167 = por %p165, %p166
    %s169 = sadd.s32 %s168, 1
    %p172 = scmp.eq.s32.totalorder %s14, 1
    %p173 = scmp.ne.s32.totalorder %s168, %s170
    %p174 = scmp.eq.s32.totalorder %s14, 0
    %p175 = por %p173, %p174
    %p176 = scmp.ne.s32.totalorder %s168, %s170
    %p177 = scmp.eq.s32.totalorder %s19, 1
    %p178 = por %p176, %p177
    %p179 = scmp.ne.s32.totalorder %s170, %s171
    %p180 = scmp.eq.s32.totalorder %s19, 0
    %p181 = por %p179, %p180
    %p182 = scmp.ne.s32.totalorder %s170, %s171
    %p183 = scmp.eq.s32.totalorder %s20, 1
    %p184 = por %p182, %p183
    %p186 = scmp.ne.s32.totalorder %s171, %s185
    %p187 = scmp.eq.s32.totalorder %s20, 0
    %p188 = por %p186, %p187
    %s190 = sadd.s32 %s189, 1
    %p193 = scmp.eq.s32.totalorder %s14, 1
    %p194 = scmp.ne.s32.totalorder %s189, %s191
    %p195 = scmp.eq.s32.totalorder %s14, 0
    %p196 = por %p194, %p195
    %p197 = scmp.ne.s32.totalorder %s189, %s191
    %p198 = scmp.eq.s32.totalorder %s19, 1
    %p199 = por %p197, %p198
    %p200 = scmp.ne.s32.totalorder %s191, %s192
    %p201 = scmp.eq.s32.totalorder %s19, 0
    %p202 = por %p200, %p201
    %p203 = scmp.ne.s32.totalorder %s191, %s192
    %p204 = scmp.eq.s32.totalorder %s20, 1
    %p205 = por %p203, %p204
    %p207 = scmp.ne.s32.totalorder %s192, %s206
    %p208 = scmp.eq.s32.totalorder %s20, 0
    %p209 = por %p207, %p208
    %s210 = ssub.s32 %s14, %s21
    %p211 = scmp.eq.s32.totalorder %s210, 0
    %s213 = sadd.s32 %s212, 1
    %s214 = scalar_select %p211, %s212, %s213
    %p217 = pneg %p211
    %p218 = scmp.eq.s32.totalorder %s14, 1
    %p219 = por %p217, %p218
    %p220 = scmp.ne.s32.totalorder %s212, %s215
    %p221 = scmp.eq.s32.totalorder %s14, 0
    %p222 = por %p220, %p221
    %p223 = scmp.ne.s32.totalorder %s212, %s215
    %p224 = scmp.eq.s32.totalorder %s19, 1
    %p225 = por %p223, %p224
    %p226 = scmp.ne.s32.totalorder %s215, %s216
    %p227 = scmp.eq.s32.totalorder %s19, 0
    %p228 = por %p226, %p227
    %p229 = scmp.ne.s32.totalorder %s215, %s216
    %p230 = scmp.eq.s32.totalorder %s20, 1
    %p231 = por %p229, %p230
    %p233 = scmp.ne.s32.totalorder %s216, %s232
    %p234 = scmp.eq.s32.totalorder %s20, 0
    %p235 = por %p233, %p234
    %p236 = scmp.le.s32.totalorder 1, %s14
    %p237 = scmp.lt.s32.totalorder %s14, 3
    %p238 = pnand %p236, %p237
    %p239 = pneg %p238
    // Predicated region
    $region9: #{gnn_inductive_node_head_jk.1} parent=5 // pred_check
      _
    $region10: #{gnn_inductive_node_head_jk.1} parent=5 // pred_check_branch
      %241 = sbr.rel (%p238) target = $region12
    $region11: #{gnn_inductive_node_head_jk.1} parent=5 // pred_region
      %s242 = ssub.s32 %s14, 1
      // Predicated region
      $region13: #{gnn_inductive_node_head_jk.1} parent=11 // pred_check
        %p243 = pneg %p139
      $region14: #{gnn_inductive_node_head_jk.1} parent=11 // pred_check_branch
        %245 = sbr.rel (%p243) target = $region16
      $region15: #{gnn_inductive_node_head_jk.1} parent=11 // pred_region
        _
      $region16: #{gnn_inductive_node_head_jk.1} parent=11 // pred_fallthru
        _
      // Predicated region
      $region17: #{gnn_inductive_node_head_jk.1} parent=11 // pred_check
        %p246 = pneg %p160
      $region18: #{gnn_inductive_node_head_jk.1} parent=11 // pred_check_branch
        %248 = sbr.rel (%p246) target = $region20
      $region19: #{gnn_inductive_node_head_jk.1} parent=11 // pred_region
        _
      $region20: #{gnn_inductive_node_head_jk.1} parent=11 // pred_fallthru
        _
      // Predicated region
      $region21: #{gnn_inductive_node_head_jk.1} parent=11 // pred_check
        %p249 = pneg %p181
      $region22: #{gnn_inductive_node_head_jk.1} parent=11 // pred_check_branch
        %251 = sbr.rel (%p249) target = $region24
      $region23: #{gnn_inductive_node_head_jk.1} parent=11 // pred_region
        _
      $region24: #{gnn_inductive_node_head_jk.1} parent=11 // pred_fallthru
        _
      // Predicated region
      $region25: #{gnn_inductive_node_head_jk.1} parent=11 // pred_check
        %p252 = pneg %p202
      $region26: #{gnn_inductive_node_head_jk.1} parent=11 // pred_check_branch
        %254 = sbr.rel (%p252) target = $region28
      $region27: #{gnn_inductive_node_head_jk.1} parent=11 // pred_region
        _
      $region28: #{gnn_inductive_node_head_jk.1} parent=11 // pred_fallthru
        _
    $region12: #{gnn_inductive_node_head_jk.1} parent=5 // pred_fallthru
      _
    %p255 = scmp.lt.s32.totalorder %s14, 2
    // Predicated region
    $region29: #{gnn_inductive_node_head_jk.1} parent=5 // pred_check
      %p256 = pneg %p255
    $region30: #{gnn_inductive_node_head_jk.1} parent=5 // pred_check_branch
      %258 = sbr.rel (%p256) target = $region32
    $region31: #{gnn_inductive_node_head_jk.1} parent=5 // pred_region
      // Predicated region
      $region33: #{gnn_inductive_node_head_jk.1} parent=31 // pred_check
        %p259 = pneg %p34
      $region34: #{gnn_inductive_node_head_jk.1} parent=31 // pred_check_branch
        %261 = sbr.rel (%p259) target = $region36
      $region35: #{gnn_inductive_node_head_jk.1} parent=31 // pred_region
        %s262 = smul.u32 8, %s14
        %p263 = scmp.lt.s32.totalorder %s262, 15
        %s264 = scalar_select %p263, %s262, 15
        %s265 = smul.addr %s264, 8
        %s266 = scalar_lea.vmem %s0, %s265
        %s267 = smul.u32 8, %s14
      $region36: #{gnn_inductive_node_head_jk.1} parent=31 // pred_fallthru
        _
      // Predicated region
      $region37: #{gnn_inductive_node_head_jk.1} parent=31 // pred_check
        %p268 = pneg %p60
      $region38: #{gnn_inductive_node_head_jk.1} parent=31 // pred_check_branch
        %270 = sbr.rel (%p268) target = $region40
      $region39: #{gnn_inductive_node_head_jk.1} parent=31 // pred_region
        %s271 = smul.u32 8, %s14
        %p272 = scmp.lt.s32.totalorder %s271, 15
        %s273 = scalar_select %p272, %s271, 15
        %s274 = smul.addr %s273, 8
        %s275 = scalar_lea.vmem %s1, %s274
        %s276 = smul.u32 8, %s14
      $region40: #{gnn_inductive_node_head_jk.1} parent=31 // pred_fallthru
        _
      // Predicated region
      $region41: #{gnn_inductive_node_head_jk.1} parent=31 // pred_check
        %p277 = pneg %p86
      $region42: #{gnn_inductive_node_head_jk.1} parent=31 // pred_check_branch
        %279 = sbr.rel (%p277) target = $region44
      $region43: #{gnn_inductive_node_head_jk.1} parent=31 // pred_region
        %s280 = smul.u32 8, %s14
        %p281 = scmp.lt.s32.totalorder %s280, 15
        %s282 = scalar_select %p281, %s280, 15
        %s283 = smul.addr %s282, 8
        %s284 = scalar_lea.vmem %s2, %s283
        %s285 = smul.u32 8, %s14
      $region44: #{gnn_inductive_node_head_jk.1} parent=31 // pred_fallthru
        _
      // Predicated region
      $region45: #{gnn_inductive_node_head_jk.1} parent=31 // pred_check
        %p286 = pneg %p112
      $region46: #{gnn_inductive_node_head_jk.1} parent=31 // pred_check_branch
        %288 = sbr.rel (%p286) target = $region48
      $region47: #{gnn_inductive_node_head_jk.1} parent=31 // pred_region
        %s289 = smul.u32 8, %s14
        %p290 = scmp.lt.s32.totalorder %s289, 15
        %s291 = scalar_select %p290, %s289, 15
        %s292 = smul.addr %s291, 8
        %s293 = scalar_lea.vmem %s3, %s292
        %s294 = smul.u32 8, %s14
      $region48: #{gnn_inductive_node_head_jk.1} parent=31 // pred_fallthru
        _
    $region32: #{gnn_inductive_node_head_jk.1} parent=5 // pred_fallthru
      _
    %p295 = scmp.le.s32.totalorder 1, %s14
    %p296 = scmp.lt.s32.totalorder %s14, 3
    %p297 = pnand %p295, %p296
    %p298 = pneg %p297
    // Predicated region
    $region49: #{gnn_inductive_node_head_jk.1} parent=5 // pred_check
      _
    $region50: #{gnn_inductive_node_head_jk.1} parent=5 // pred_check_branch
      %300 = sbr.rel (%p297) target = $region52
    $region51: #{gnn_inductive_node_head_jk.1} parent=5 // pred_region
      %s301 = ssub.s32 %s14, 1
      %s302 = smul.u32 8, %s19
      %p303 = scmp.lt.s32.totalorder %s302, 15
      %s304 = scalar_select %p303, %s302, 15
      %s305 = smul.addr %s304, 8
      %s306 = scalar_lea.vmem %s0, %s305
      %p307 = pneg %p40
      %p308 = pneg %p37
      %s309 = smul.u32 8, %s19
      %p310 = scmp.lt.s32.totalorder %s309, 15
      %s311 = scalar_select %p310, %s309, 15
      %s312 = smul.addr %s311, 8
      %s313 = scalar_lea.vmem %s1, %s312
      %p314 = pneg %p66
      %p315 = pneg %p63
      %s316 = smul.u32 8, %s19
      %p317 = scmp.lt.s32.totalorder %s316, 15
      %s318 = scalar_select %p317, %s316, 15
      %s319 = smul.addr %s318, 8
      %s320 = scalar_lea.vmem %s2, %s319
      %p321 = pneg %p92
      %p322 = pneg %p89
      %s323 = smul.u32 8, %s19
      %p324 = scmp.lt.s32.totalorder %s323, 15
      %s325 = scalar_select %p324, %s323, 15
      %s326 = smul.addr %s325, 8
      %s327 = scalar_lea.vmem %s3, %s326
      %p328 = pneg %p118
      %p329 = pneg %p115
      %p330 = pneg %p139
      %p331 = pneg %p136
      %p332 = pneg %p160
      %p333 = pneg %p157
      %p334 = pneg %p181
      %p335 = pneg %p178
      %p336 = pneg %p202
      %p337 = pneg %p199
      %p338 = pneg %p228
      %p339 = pneg %p225
      %s340 = smul.u32 8, %s19
      %p341 = scmp.lt.s32.totalorder %s340, 15
      %s342 = scalar_select %p341, %s340, 15
      %s343 = smul.addr %s342, 8
      %s344 = scalar_lea.vmem %s8, %s343
      %s345 = smul.u32 8, %s19
      %p346 = scmp.lt.s32.totalorder %s345, 15
      %s347 = scalar_select %p346, %s345, 15
      %s348 = smul.addr %s347, 8
      %s349 = scalar_lea.vmem %s0, %s348
      %s350 = smul.u32 8, %s19
      %s351 = smul.u32 8, %s19
      %p352 = scmp.lt.s32.totalorder %s351, 15
      %s353 = scalar_select %p352, %s351, 15
      %s354 = smul.addr %s353, 8
      %s355 = scalar_lea.vmem %s1, %s354
      %s356 = smul.u32 8, %s19
      %s357 = smul.u32 8, %s19
      %p358 = scmp.lt.s32.totalorder %s357, 15
      %s359 = scalar_select %p358, %s357, 15
      %s360 = smul.addr %s359, 8
      %s361 = scalar_lea.vmem %s2, %s360
      %s362 = smul.u32 8, %s19
      %s363 = smul.u32 8, %s19
      %p364 = scmp.lt.s32.totalorder %s363, 15
      %s365 = scalar_select %p364, %s363, 15
      %s366 = smul.addr %s365, 8
      %s367 = scalar_lea.vmem %s3, %s366
      %s368 = smul.u32 8, %s19
      %s369 = smul.u32 8, %s19
      %p370 = scmp.lt.s32.totalorder %s369, 15
      %s371 = scalar_select %p370, %s369, 15
      %s372 = smul.addr %s371, 8
      %s373 = scalar_lea.vmem %s8, %s372
      %s374 = smul.u32 8, %s19
      %v375 = vld [vmem:[%s349] sm:$0xff]
      %v376 = vld [vmem:[%s349 + $0x8] sm:$0xff]
      %v377 = vld [vmem:[%s349 + $0x10] sm:$0xff]
      %v378 = vld [vmem:[%s349 + $0x18] sm:$0xff]
      %v379 = vld [vmem:[%s349 + $0x20] sm:$0xff]
      %v380 = vld [vmem:[%s349 + $0x28] sm:$0xff]
      %v381 = vld [vmem:[%s349 + $0x30] sm:$0xff]
      %v382 = vld [vmem:[%s349 + $0x38] sm:$0xff]
      %v383 = vld [vmem:[%s4] sm:$0xff]
      %v384 = vld [vmem:[%s4 + $0x8] sm:$0xff]
      %v385 = vld [vmem:[%s4 + $0x10] sm:$0xff]
      %v386 = vld [vmem:[%s4 + $0x18] sm:$0xff]
      %v387 = vld [vmem:[%s355] sm:$0xff]
      %v388 = vld [vmem:[%s355 + $0x8] sm:$0xff]
      %v389 = vld [vmem:[%s355 + $0x10] sm:$0xff]
      %v390 = vld [vmem:[%s355 + $0x18] sm:$0xff]
      %v391 = vld [vmem:[%s355 + $0x20] sm:$0xff]
      %v392 = vld [vmem:[%s355 + $0x28] sm:$0xff]
      %v393 = vld [vmem:[%s355 + $0x30] sm:$0xff]
      %v394 = vld [vmem:[%s355 + $0x38] sm:$0xff]
      %s395 = scalar_lea.vmem %s4, 32
      %v396 = vld [vmem:[%s395] sm:$0xff]
      %v397 = vld [vmem:[%s395 + $0x8] sm:$0xff]
      %v398 = vld [vmem:[%s395 + $0x10] sm:$0xff]
      %v399 = vld [vmem:[%s395 + $0x18] sm:$0xff]
      %vm400 = vcmask 261120
      %v402 = vsel %vm400, %v387, 0
      %v405 = vsel %vm400, %v388, 0
      %v408 = vsel %vm400, %v389, 0
      %v411 = vsel %vm400, %v390, 0
      %v414 = vsel %vm400, %v391, 0
      %v417 = vsel %vm400, %v392, 0
      %v420 = vsel %vm400, %v393, 0
      %v423 = vsel %vm400, %v394, 0
      %425 = vmatprep.subr.mxu0 0.0
      %426 = vmatpush1.msra.mxu0 0.0
      %427 = vmatprep.subr.mxu0 0.0
      %428 = vmatpush1.msra.mxu0 0.0
      %429 = vmatprep.subr.mxu0 0.0
      %430 = vmatpush1.msra.mxu0 0.0
      %431 = vmatprep.subr.mxu0 0.0
      %432 = vmatpush1.msra.mxu0 0.0
      %433 = vmatprep.subr.mxu0 0.0
      %434 = vmatpush1.msra.mxu0 0.0
      %435 = vmatprep.subr.mxu0 0.0
      %436 = vmatpush1.msra.mxu0 0.0
      %437 = vmatprep.subr.mxu0 0.0
      %438 = vmatpush1.msra.mxu0 0.0
      %439 = vmatprep.subr.mxu0 0.0
      %440 = vmatpush1.msra.mxu0 0.0
      %441 = vmatprep.subr.mxu0 0.0
      %442 = vmatpush1.msra.mxu0 0.0
      %443 = vmatprep.subr.mxu0 0.0
      %444 = vmatpush1.msra.mxu0 0.0
      %445 = vmatprep.subr.mxu0 0.0
      %446 = vmatpush1.msra.mxu0 0.0
      %447 = vmatprep.subr.mxu0 0.0
      %448 = vmatpush1.msra.mxu0 0.0
      %449 = vmatprep.subr.mxu0 0.0
      %450 = vmatpush1.msra.mxu0 %v399
      %451 = vmatprep.subr.mxu0 0.0
      %452 = vmatpush1.msra.mxu0 %v398
      %453 = vmatprep.subr.mxu0 0.0
      %454 = vmatpush1.msra.mxu0 %v397
      %455 = vmatprep.subr.mxu0 0.0
      %456 = vmatpush1.msra.mxu0 %v396
      %457 = vmatprep.subr.mxu0 0.0
      %458 = vmatpush2.msra.mxu0 0.0
      %459 = vmatprep.subr.mxu0 0.0
      %460 = vmatpush2.msra.mxu0 0.0
      %461 = vmatprep.subr.mxu0 0.0
      %462 = vmatpush2.msra.mxu0 0.0
      %463 = vmatprep.subr.mxu0 0.0
      %464 = vmatpush2.msra.mxu0 0.0
      %465 = vmatprep.subr.mxu0 0.0
      %466 = vmatpush2.msra.mxu0 0.0
      %467 = vmatprep.subr.mxu0 0.0
      %468 = vmatpush2.msra.mxu0 0.0
      %469 = vmatprep.subr.mxu0 0.0
      %470 = vmatpush2.msra.mxu0 0.0
      %471 = vmatprep.subr.mxu0 0.0
      %472 = vmatpush2.msra.mxu0 0.0
      %473 = vmatprep.subr.mxu0 0.0
      %474 = vmatpush2.msra.mxu0 0.0
      %475 = vmatprep.subr.mxu0 0.0
      %476 = vmatpush2.msra.mxu0 0.0
      %477 = vmatprep.subr.mxu0 0.0
      %478 = vmatpush2.msra.mxu0 0.0
      %479 = vmatprep.subr.mxu0 0.0
      %480 = vmatpush2.msra.mxu0 0.0
      %481 = vmatprep.subr.mxu0 0.0
      %482 = vmatpush2.msra.mxu0 0.0
      %483 = vmatprep.subr.mxu0 0.0
      %484 = vmatpush2.msra.mxu0 0.0
      %485 = vmatprep.subr.mxu0 0.0
      %486 = vmatpush2.msra.mxu0 0.0
      %487 = vmatprep.subr.mxu0 0.0
      %488 = vmatpush2.msra.mxu0 0.0
      %489 = vmatprep.mubr.f32.mxu0 0.0
      %490 = vmatmul.mubr.f32.gmra.mxu0 %v402
      %v491 = vpop.f32.mrf.mxu0
      %v492 = vadd.f32 0.0, %v491
      %v493 = vpop.f32.mrf.mxu0
      %494 = vmatprep.mubr.f32.mxu0 0.0
      %495 = vmatmul.mubr.f32.gmra.mxu0 %v405
      %v496 = vpop.f32.mrf.mxu0
      %v497 = vadd.f32 0.0, %v496
      %v498 = vpop.f32.mrf.mxu0
      %499 = vmatprep.mubr.f32.mxu0 0.0
      %500 = vmatmul.mubr.f32.gmra.mxu0 %v408
      %v501 = vpop.f32.mrf.mxu0
      %v502 = vadd.f32 0.0, %v501
      %v503 = vpop.f32.mrf.mxu0
      %504 = vmatprep.mubr.f32.mxu0 0.0
      %505 = vmatmul.mubr.f32.gmra.mxu0 %v411
      %v506 = vpop.f32.mrf.mxu0
      %v507 = vadd.f32 0.0, %v506
      %v508 = vpop.f32.mrf.mxu0
      %509 = vmatprep.mubr.f32.mxu0 0.0
      %510 = vmatmul.mubr.f32.gmra.mxu0 %v414
      %v511 = vpop.f32.mrf.mxu0
      %v512 = vadd.f32 0.0, %v511
      %v513 = vpop.f32.mrf.mxu0
      %514 = vmatprep.mubr.f32.mxu0 0.0
      %515 = vmatmul.mubr.f32.gmra.mxu0 %v417
      %v516 = vpop.f32.mrf.mxu0
      %v517 = vadd.f32 0.0, %v516
      %v518 = vpop.f32.mrf.mxu0
      %519 = vmatprep.mubr.f32.mxu0 0.0
      %520 = vmatmul.mubr.f32.gmra.mxu0 %v420
      %v521 = vpop.f32.mrf.mxu0
      %v522 = vadd.f32 0.0, %v521
      %v523 = vpop.f32.mrf.mxu0
      %524 = vmatprep.mubr.f32.mxu0 0.0
      %525 = vmatmul.mubr.f32.gmra.mxu0 %v423
      %v526 = vpop.f32.mrf.mxu0
      %v527 = vadd.f32 0.0, %v526
      %v528 = vpop.f32.mrf.mxu0
      %529 = vdwg.mxu0
      %v531 = vsel %vm400, %v375, 0
      %v534 = vsel %vm400, %v376, 0
      %v537 = vsel %vm400, %v377, 0
      %v540 = vsel %vm400, %v378, 0
      %v543 = vsel %vm400, %v379, 0
      %v546 = vsel %vm400, %v380, 0
      %v549 = vsel %vm400, %v381, 0
      %v552 = vsel %vm400, %v382, 0
      %554 = vmatprep.subr.mxu0 0.0
      %555 = vmatpush1.msra.mxu0 0.0
      %556 = vmatprep.subr.mxu0 0.0
      %557 = vmatpush1.msra.mxu0 0.0
      %558 = vmatprep.subr.mxu0 0.0
      %559 = vmatpush1.msra.mxu0 0.0
      %560 = vmatprep.subr.mxu0 0.0
      %561 = vmatpush1.msra.mxu0 0.0
      %562 = vmatprep.subr.mxu0 0.0
      %563 = vmatpush1.msra.mxu0 0.0
      %564 = vmatprep.subr.mxu0 0.0
      %565 = vmatpush1.msra.mxu0 0.0
      %566 = vmatprep.subr.mxu0 0.0
      %567 = vmatpush1.msra.mxu0 0.0
      %568 = vmatprep.subr.mxu0 0.0
      %569 = vmatpush1.msra.mxu0 0.0
      %570 = vmatprep.subr.mxu0 0.0
      %571 = vmatpush1.msra.mxu0 0.0
      %572 = vmatprep.subr.mxu0 0.0
      %573 = vmatpush1.msra.mxu0 0.0
      %574 = vmatprep.subr.mxu0 0.0
      %575 = vmatpush1.msra.mxu0 0.0
      %576 = vmatprep.subr.mxu0 0.0
      %577 = vmatpush1.msra.mxu0 0.0
      %578 = vmatprep.subr.mxu0 0.0
      %579 = vmatpush1.msra.mxu0 %v386
      %580 = vmatprep.subr.mxu0 0.0
      %581 = vmatpush1.msra.mxu0 %v385
      %582 = vmatprep.subr.mxu0 0.0
      %583 = vmatpush1.msra.mxu0 %v384
      %584 = vmatprep.subr.mxu0 0.0
      %585 = vmatpush1.msra.mxu0 %v383
      %586 = vmatprep.subr.mxu0 0.0
      %587 = vmatpush2.msra.mxu0 0.0
      %588 = vmatprep.subr.mxu0 0.0
      %589 = vmatpush2.msra.mxu0 0.0
      %590 = vmatprep.subr.mxu0 0.0
      %591 = vmatpush2.msra.mxu0 0.0
      %592 = vmatprep.subr.mxu0 0.0
      %593 = vmatpush2.msra.mxu0 0.0
      %594 = vmatprep.subr.mxu0 0.0
      %595 = vmatpush2.msra.mxu0 0.0
      %596 = vmatprep.subr.mxu0 0.0
      %597 = vmatpush2.msra.mxu0 0.0
      %598 = vmatprep.subr.mxu0 0.0
      %599 = vmatpush2.msra.mxu0 0.0
      %600 = vmatprep.subr.mxu0 0.0
      %601 = vmatpush2.msra.mxu0 0.0
      %602 = vmatprep.subr.mxu0 0.0
      %603 = vmatpush2.msra.mxu0 0.0
      %604 = vmatprep.subr.mxu0 0.0
      %605 = vmatpush2.msra.mxu0 0.0
      %606 = vmatprep.subr.mxu0 0.0
      %607 = vmatpush2.msra.mxu0 0.0
      %608 = vmatprep.subr.mxu0 0.0
      %609 = vmatpush2.msra.mxu0 0.0
      %610 = vmatprep.subr.mxu0 0.0
      %611 = vmatpush2.msra.mxu0 0.0
      %612 = vmatprep.subr.mxu0 0.0
      %613 = vmatpush2.msra.mxu0 0.0
      %614 = vmatprep.subr.mxu0 0.0
      %615 = vmatpush2.msra.mxu0 0.0
      %616 = vmatprep.subr.mxu0 0.0
      %617 = vmatpush2.msra.mxu0 0.0
      %618 = vmatprep.mubr.f32.mxu0 0.0
      %619 = vmatmul.mubr.f32.gmra.mxu0 %v531
      %v620 = vpop.f32.mrf.mxu0
      %v621 = vadd.f32 %v492, %v620
      %v622 = vpop.f32.mrf.mxu0
      %623 = vmatprep.mubr.f32.mxu0 0.0
      %624 = vmatmul.mubr.f32.gmra.mxu0 %v534
      %v625 = vpop.f32.mrf.mxu0
      %v626 = vadd.f32 %v497, %v625
      %v627 = vpop.f32.mrf.mxu0
      %628 = vmatprep.mubr.f32.mxu0 0.0
      %629 = vmatmul.mubr.f32.gmra.mxu0 %v537
      %v630 = vpop.f32.mrf.mxu0
      %v631 = vadd.f32 %v502, %v630
      %v632 = vpop.f32.mrf.mxu0
      %633 = vmatprep.mubr.f32.mxu0 0.0
      %634 = vmatmul.mubr.f32.gmra.mxu0 %v540
      %v635 = vpop.f32.mrf.mxu0
      %v636 = vadd.f32 %v507, %v635
      %v637 = vpop.f32.mrf.mxu0
      %638 = vmatprep.mubr.f32.mxu0 0.0
      %639 = vmatmul.mubr.f32.gmra.mxu0 %v543
      %v640 = vpop.f32.mrf.mxu0
      %v641 = vadd.f32 %v512, %v640
      %v642 = vpop.f32.mrf.mxu0
      %643 = vmatprep.mubr.f32.mxu0 0.0
      %644 = vmatmul.mubr.f32.gmra.mxu0 %v546
      %v645 = vpop.f32.mrf.mxu0
      %v646 = vadd.f32 %v517, %v645
      %v647 = vpop.f32.mrf.mxu0
      %648 = vmatprep.mubr.f32.mxu0 0.0
      %649 = vmatmul.mubr.f32.gmra.mxu0 %v549
      %v650 = vpop.f32.mrf.mxu0
      %v651 = vadd.f32 %v522, %v650
      %v652 = vpop.f32.mrf.mxu0
      %653 = vmatprep.mubr.f32.mxu0 0.0
      %654 = vmatmul.mubr.f32.gmra.mxu0 %v552
      %v655 = vpop.f32.mrf.mxu0
      %v656 = vadd.f32 %v527, %v655
      %v657 = vpop.f32.mrf.mxu0
      %658 = vdwg.mxu0
      %v659 = vld [vmem:[%s361] sm:$0xff]
      %v660 = vld [vmem:[%s361 + $0x8] sm:$0xff]
      %v661 = vld [vmem:[%s361 + $0x10] sm:$0xff]
      %v662 = vld [vmem:[%s361 + $0x18] sm:$0xff]
      %v663 = vld [vmem:[%s361 + $0x20] sm:$0xff]
      %v664 = vld [vmem:[%s361 + $0x28] sm:$0xff]
      %v665 = vld [vmem:[%s361 + $0x30] sm:$0xff]
      %v666 = vld [vmem:[%s361 + $0x38] sm:$0xff]
      %s667 = scalar_lea.vmem %s4, 64
      %v668 = vld [vmem:[%s667] sm:$0xff]
      %v669 = vld [vmem:[%s667 + $0x8] sm:$0xff]
      %v670 = vld [vmem:[%s667 + $0x10] sm:$0xff]
      %v671 = vld [vmem:[%s667 + $0x18] sm:$0xff]
      %v673 = vsel %vm400, %v659, 0
      %v676 = vsel %vm400, %v660, 0
      %v679 = vsel %vm400, %v661, 0
      %v682 = vsel %vm400, %v662, 0
      %v685 = vsel %vm400, %v663, 0
      %v688 = vsel %vm400, %v664, 0
      %v691 = vsel %vm400, %v665, 0
      %v694 = vsel %vm400, %v666, 0
      %696 = vmatprep.subr.mxu0 0.0
      %697 = vmatpush1.msra.mxu0 0.0
      %698 = vmatprep.subr.mxu0 0.0
      %699 = vmatpush1.msra.mxu0 0.0
      %700 = vmatprep.subr.mxu0 0.0
      %701 = vmatpush1.msra.mxu0 0.0
      %702 = vmatprep.subr.mxu0 0.0
      %703 = vmatpush1.msra.mxu0 0.0
      %704 = vmatprep.subr.mxu0 0.0
      %705 = vmatpush1.msra.mxu0 0.0
      %706 = vmatprep.subr.mxu0 0.0
      %707 = vmatpush1.msra.mxu0 0.0
      %708 = vmatprep.subr.mxu0 0.0
      %709 = vmatpush1.msra.mxu0 0.0
      %710 = vmatprep.subr.mxu0 0.0
      %711 = vmatpush1.msra.mxu0 0.0
      %712 = vmatprep.subr.mxu0 0.0
      %713 = vmatpush1.msra.mxu0 0.0
      %714 = vmatprep.subr.mxu0 0.0
      %715 = vmatpush1.msra.mxu0 0.0
      %716 = vmatprep.subr.mxu0 0.0
      %717 = vmatpush1.msra.mxu0 0.0
      %718 = vmatprep.subr.mxu0 0.0
      %719 = vmatpush1.msra.mxu0 0.0
      %720 = vmatprep.subr.mxu0 0.0
      %721 = vmatpush1.msra.mxu0 %v671
      %722 = vmatprep.subr.mxu0 0.0
      %723 = vmatpush1.msra.mxu0 %v670
      %724 = vmatprep.subr.mxu0 0.0
      %725 = vmatpush1.msra.mxu0 %v669
      %726 = vmatprep.subr.mxu0 0.0
      %727 = vmatpush1.msra.mxu0 %v668
      %728 = vmatprep.subr.mxu0 0.0
      %729 = vmatpush2.msra.mxu0 0.0
      %730 = vmatprep.subr.mxu0 0.0
      %731 = vmatpush2.msra.mxu0 0.0
      %732 = vmatprep.subr.mxu0 0.0
      %733 = vmatpush2.msra.mxu0 0.0
      %734 = vmatprep.subr.mxu0 0.0
      %735 = vmatpush2.msra.mxu0 0.0
      %736 = vmatprep.subr.mxu0 0.0
      %737 = vmatpush2.msra.mxu0 0.0
      %738 = vmatprep.subr.mxu0 0.0
      %739 = vmatpush2.msra.mxu0 0.0
      %740 = vmatprep.subr.mxu0 0.0
      %741 = vmatpush2.msra.mxu0 0.0
      %742 = vmatprep.subr.mxu0 0.0
      %743 = vmatpush2.msra.mxu0 0.0
      %744 = vmatprep.subr.mxu0 0.0
      %745 = vmatpush2.msra.mxu0 0.0
      %746 = vmatprep.subr.mxu0 0.0
      %747 = vmatpush2.msra.mxu0 0.0
      %748 = vmatprep.subr.mxu0 0.0
      %749 = vmatpush2.msra.mxu0 0.0
      %750 = vmatprep.subr.mxu0 0.0
      %751 = vmatpush2.msra.mxu0 0.0
      %752 = vmatprep.subr.mxu0 0.0
      %753 = vmatpush2.msra.mxu0 0.0
      %754 = vmatprep.subr.mxu0 0.0
      %755 = vmatpush2.msra.mxu0 0.0
      %756 = vmatprep.subr.mxu0 0.0
      %757 = vmatpush2.msra.mxu0 0.0
      %758 = vmatprep.subr.mxu0 0.0
      %759 = vmatpush2.msra.mxu0 0.0
      %760 = vmatprep.mubr.f32.mxu0 0.0
      %761 = vmatmul.mubr.f32.gmra.mxu0 %v673
      %v762 = vpop.f32.mrf.mxu0
      %v763 = vadd.f32 0.0, %v762
      %v764 = vpop.f32.mrf.mxu0
      %765 = vmatprep.mubr.f32.mxu0 0.0
      %766 = vmatmul.mubr.f32.gmra.mxu0 %v676
      %v767 = vpop.f32.mrf.mxu0
      %v768 = vadd.f32 0.0, %v767
      %v769 = vpop.f32.mrf.mxu0
      %770 = vmatprep.mubr.f32.mxu0 0.0
      %771 = vmatmul.mubr.f32.gmra.mxu0 %v679
      %v772 = vpop.f32.mrf.mxu0
      %v773 = vadd.f32 0.0, %v772
      %v774 = vpop.f32.mrf.mxu0
      %775 = vmatprep.mubr.f32.mxu0 0.0
      %776 = vmatmul.mubr.f32.gmra.mxu0 %v682
      %v777 = vpop.f32.mrf.mxu0
      %v778 = vadd.f32 0.0, %v777
      %v779 = vpop.f32.mrf.mxu0
      %780 = vmatprep.mubr.f32.mxu0 0.0
      %781 = vmatmul.mubr.f32.gmra.mxu0 %v685
      %v782 = vpop.f32.mrf.mxu0
      %v783 = vadd.f32 0.0, %v782
      %v784 = vpop.f32.mrf.mxu0
      %785 = vmatprep.mubr.f32.mxu0 0.0
      %786 = vmatmul.mubr.f32.gmra.mxu0 %v688
      %v787 = vpop.f32.mrf.mxu0
      %v788 = vadd.f32 0.0, %v787
      %v789 = vpop.f32.mrf.mxu0
      %790 = vmatprep.mubr.f32.mxu0 0.0
      %791 = vmatmul.mubr.f32.gmra.mxu0 %v691
      %v792 = vpop.f32.mrf.mxu0
      %v793 = vadd.f32 0.0, %v792
      %v794 = vpop.f32.mrf.mxu0
      %795 = vmatprep.mubr.f32.mxu0 0.0
      %796 = vmatmul.mubr.f32.gmra.mxu0 %v694
      %v797 = vpop.f32.mrf.mxu0
      %v798 = vadd.f32 0.0, %v797
      %v799 = vpop.f32.mrf.mxu0
      %800 = vdwg.mxu0
      %v801 = vadd.f32 %v621, %v763
      %v802 = vadd.f32 %v626, %v768
      %v803 = vadd.f32 %v631, %v773
      %v804 = vadd.f32 %v636, %v778
      %v805 = vadd.f32 %v641, %v783
      %v806 = vadd.f32 %v646, %v788
      %v807 = vadd.f32 %v651, %v793
      %v808 = vadd.f32 %v656, %v798
      %v809 = vld [vmem:[%s367] sm:$0xff]
      %v810 = vld [vmem:[%s367 + $0x8] sm:$0xff]
      %v811 = vld [vmem:[%s367 + $0x10] sm:$0xff]
      %v812 = vld [vmem:[%s367 + $0x18] sm:$0xff]
      %v813 = vld [vmem:[%s367 + $0x20] sm:$0xff]
      %v814 = vld [vmem:[%s367 + $0x28] sm:$0xff]
      %v815 = vld [vmem:[%s367 + $0x30] sm:$0xff]
      %v816 = vld [vmem:[%s367 + $0x38] sm:$0xff]
      %s817 = scalar_lea.vmem %s4, 96
      %v818 = vld [vmem:[%s817] sm:$0xff]
      %v819 = vld [vmem:[%s817 + $0x8] sm:$0xff]
      %v820 = vld [vmem:[%s817 + $0x10] sm:$0xff]
      %v821 = vld [vmem:[%s817 + $0x18] sm:$0xff]
      %v823 = vsel %vm400, %v809, 0
      %v826 = vsel %vm400, %v810, 0
      %v829 = vsel %vm400, %v811, 0
      %v832 = vsel %vm400, %v812, 0
      %v835 = vsel %vm400, %v813, 0
      %v838 = vsel %vm400, %v814, 0
      %v841 = vsel %vm400, %v815, 0
      %v844 = vsel %vm400, %v816, 0
      %846 = vmatprep.subr.mxu0 0.0
      %847 = vmatpush1.msra.mxu0 0.0
      %848 = vmatprep.subr.mxu0 0.0
      %849 = vmatpush1.msra.mxu0 0.0
      %850 = vmatprep.subr.mxu0 0.0
      %851 = vmatpush1.msra.mxu0 0.0
      %852 = vmatprep.subr.mxu0 0.0
      %853 = vmatpush1.msra.mxu0 0.0
      %854 = vmatprep.subr.mxu0 0.0
      %855 = vmatpush1.msra.mxu0 0.0
      %856 = vmatprep.subr.mxu0 0.0
      %857 = vmatpush1.msra.mxu0 0.0
      %858 = vmatprep.subr.mxu0 0.0
      %859 = vmatpush1.msra.mxu0 0.0
      %860 = vmatprep.subr.mxu0 0.0
      %861 = vmatpush1.msra.mxu0 0.0
      %862 = vmatprep.subr.mxu0 0.0
      %863 = vmatpush1.msra.mxu0 0.0
      %864 = vmatprep.subr.mxu0 0.0
      %865 = vmatpush1.msra.mxu0 0.0
      %866 = vmatprep.subr.mxu0 0.0
      %867 = vmatpush1.msra.mxu0 0.0
      %868 = vmatprep.subr.mxu0 0.0
      %869 = vmatpush1.msra.mxu0 0.0
      %870 = vmatprep.subr.mxu0 0.0
      %871 = vmatpush1.msra.mxu0 %v821
      %872 = vmatprep.subr.mxu0 0.0
      %873 = vmatpush1.msra.mxu0 %v820
      %874 = vmatprep.subr.mxu0 0.0
      %875 = vmatpush1.msra.mxu0 %v819
      %876 = vmatprep.subr.mxu0 0.0
      %877 = vmatpush1.msra.mxu0 %v818
      %878 = vmatprep.subr.mxu0 0.0
      %879 = vmatpush2.msra.mxu0 0.0
      %880 = vmatprep.subr.mxu0 0.0
      %881 = vmatpush2.msra.mxu0 0.0
      %882 = vmatprep.subr.mxu0 0.0
      %883 = vmatpush2.msra.mxu0 0.0
      %884 = vmatprep.subr.mxu0 0.0
      %885 = vmatpush2.msra.mxu0 0.0
      %886 = vmatprep.subr.mxu0 0.0
      %887 = vmatpush2.msra.mxu0 0.0
      %888 = vmatprep.subr.mxu0 0.0
      %889 = vmatpush2.msra.mxu0 0.0
      %890 = vmatprep.subr.mxu0 0.0
      %891 = vmatpush2.msra.mxu0 0.0
      %892 = vmatprep.subr.mxu0 0.0
      %893 = vmatpush2.msra.mxu0 0.0
      %894 = vmatprep.subr.mxu0 0.0
      %895 = vmatpush2.msra.mxu0 0.0
      %896 = vmatprep.subr.mxu0 0.0
      %897 = vmatpush2.msra.mxu0 0.0
      %898 = vmatprep.subr.mxu0 0.0
      %899 = vmatpush2.msra.mxu0 0.0
      %900 = vmatprep.subr.mxu0 0.0
      %901 = vmatpush2.msra.mxu0 0.0
      %902 = vmatprep.subr.mxu0 0.0
      %903 = vmatpush2.msra.mxu0 0.0
      %904 = vmatprep.subr.mxu0 0.0
      %905 = vmatpush2.msra.mxu0 0.0
      %906 = vmatprep.subr.mxu0 0.0
      %907 = vmatpush2.msra.mxu0 0.0
      %908 = vmatprep.subr.mxu0 0.0
      %909 = vmatpush2.msra.mxu0 0.0
      %910 = vmatprep.mubr.f32.mxu0 0.0
      %911 = vmatmul.mubr.f32.gmra.mxu0 %v823
      %v912 = vpop.f32.mrf.mxu0
      %v913 = vadd.f32 0.0, %v912
      %v914 = vpop.f32.mrf.mxu0
      %915 = vmatprep.mubr.f32.mxu0 0.0
      %916 = vmatmul.mubr.f32.gmra.mxu0 %v826
      %v917 = vpop.f32.mrf.mxu0
      %v918 = vadd.f32 0.0, %v917
      %v919 = vpop.f32.mrf.mxu0
      %920 = vmatprep.mubr.f32.mxu0 0.0
      %921 = vmatmul.mubr.f32.gmra.mxu0 %v829
      %v922 = vpop.f32.mrf.mxu0
      %v923 = vadd.f32 0.0, %v922
      %v924 = vpop.f32.mrf.mxu0
      %925 = vmatprep.mubr.f32.mxu0 0.0
      %926 = vmatmul.mubr.f32.gmra.mxu0 %v832
      %v927 = vpop.f32.mrf.mxu0
      %v928 = vadd.f32 0.0, %v927
      %v929 = vpop.f32.mrf.mxu0
      %930 = vmatprep.mubr.f32.mxu0 0.0
      %931 = vmatmul.mubr.f32.gmra.mxu0 %v835
      %v932 = vpop.f32.mrf.mxu0
      %v933 = vadd.f32 0.0, %v932
      %v934 = vpop.f32.mrf.mxu0
      %935 = vmatprep.mubr.f32.mxu0 0.0
      %936 = vmatmul.mubr.f32.gmra.mxu0 %v838
      %v937 = vpop.f32.mrf.mxu0
      %v938 = vadd.f32 0.0, %v937
      %v939 = vpop.f32.mrf.mxu0
      %940 = vmatprep.mubr.f32.mxu0 0.0
      %941 = vmatmul.mubr.f32.gmra.mxu0 %v841
      %v942 = vpop.f32.mrf.mxu0
      %v943 = vadd.f32 0.0, %v942
      %v944 = vpop.f32.mrf.mxu0
      %945 = vmatprep.mubr.f32.mxu0 0.0
      %946 = vmatmul.mubr.f32.gmra.mxu0 %v844
      %v947 = vpop.f32.mrf.mxu0
      %v948 = vadd.f32 0.0, %v947
      %v949 = vpop.f32.mrf.mxu0
      %950 = vdwg.mxu0
      %v951 = vadd.f32 %v801, %v913
      %v952 = vadd.f32 %v802, %v918
      %v953 = vadd.f32 %v803, %v923
      %v954 = vadd.f32 %v804, %v928
      %v955 = vadd.f32 %v805, %v933
      %v956 = vadd.f32 %v806, %v938
      %v957 = vadd.f32 %v807, %v943
      %v958 = vadd.f32 %v808, %v948
      %v959 = vld [vmem:[%s5] sm:$0x1]
      %v961 = vlaneseq
      %v962 = vshrl.u32 %v961, 7
      %v963 = vsub.s32 0, %v962
      %v964 = vrot.slane %v959, %v963
      %v966 = vadd.f32 %v951, %v964
      %v967 = vadd.f32 %v952, %v964
      %v968 = vadd.f32 %v953, %v964
      %v969 = vadd.f32 %v954, %v964
      %v970 = vadd.f32 %v955, %v964
      %v971 = vadd.f32 %v956, %v964
      %v972 = vadd.f32 %v957, %v964
      %v973 = vadd.f32 %v958, %v964
      %v974 = vmax.f32 %v966, 0.0
      %v975 = vmax.f32 %v967, 0.0
      %v976 = vmax.f32 %v968, 0.0
      %v977 = vmax.f32 %v969, 0.0
      %v978 = vmax.f32 %v970, 0.0
      %v979 = vmax.f32 %v971, 0.0
      %v980 = vmax.f32 %v972, 0.0
      %v981 = vmax.f32 %v973, 0.0
      %v982 = vld [vmem:[%s6] sm:$0xff]
      %v983 = vld [vmem:[%s6 + $0x8] sm:$0xff]
      %v984 = vld [vmem:[%s6 + $0x10] sm:$0xff]
      %v985 = vld [vmem:[%s6 + $0x18] sm:$0xff]
      %v986 = vld [vmem:[%s7] sm:$0x1]
      %v988 = vlaneseq
      %v989 = vshrl.u32 %v988, 7
      %v990 = vsub.s32 0, %v989
      %v991 = vrot.slane %v986, %v990
      %v994 = vsel %vm400, %v974, 0
      %v997 = vsel %vm400, %v975, 0
      %v1000 = vsel %vm400, %v976, 0
      %v1003 = vsel %vm400, %v977, 0
      %v1006 = vsel %vm400, %v978, 0
      %v1009 = vsel %vm400, %v979, 0
      %v1012 = vsel %vm400, %v980, 0
      %v1015 = vsel %vm400, %v981, 0
      %1017 = vmatprep.subr.mxu0 0.0
      %1018 = vmatpush1.msra.mxu0 0.0
      %1019 = vmatprep.subr.mxu0 0.0
      %1020 = vmatpush1.msra.mxu0 0.0
      %1021 = vmatprep.subr.mxu0 0.0
      %1022 = vmatpush1.msra.mxu0 0.0
      %1023 = vmatprep.subr.mxu0 0.0
      %1024 = vmatpush1.msra.mxu0 0.0
      %1025 = vmatprep.subr.mxu0 0.0
      %1026 = vmatpush1.msra.mxu0 0.0
      %1027 = vmatprep.subr.mxu0 0.0
      %1028 = vmatpush1.msra.mxu0 0.0
      %1029 = vmatprep.subr.mxu0 0.0
      %1030 = vmatpush1.msra.mxu0 0.0
      %1031 = vmatprep.subr.mxu0 0.0
      %1032 = vmatpush1.msra.mxu0 0.0
      %1033 = vmatprep.subr.mxu0 0.0
      %1034 = vmatpush1.msra.mxu0 0.0
      %1035 = vmatprep.subr.mxu0 0.0
      %1036 = vmatpush1.msra.mxu0 0.0
      %1037 = vmatprep.subr.mxu0 0.0
      %1038 = vmatpush1.msra.mxu0 0.0
      %1039 = vmatprep.subr.mxu0 0.0
      %1040 = vmatpush1.msra.mxu0 0.0
      %1041 = vmatprep.subr.mxu0 0.0
      %1042 = vmatpush1.msra.mxu0 %v985
      %1043 = vmatprep.subr.mxu0 0.0
      %1044 = vmatpush1.msra.mxu0 %v984
      %1045 = vmatprep.subr.mxu0 0.0
      %1046 = vmatpush1.msra.mxu0 %v983
      %1047 = vmatprep.subr.mxu0 0.0
      %1048 = vmatpush1.msra.mxu0 %v982
      %1049 = vmatprep.subr.mxu0 0.0
      %1050 = vmatpush2.msra.mxu0 0.0
      %1051 = vmatprep.subr.mxu0 0.0
      %1052 = vmatpush2.msra.mxu0 0.0
      %1053 = vmatprep.subr.mxu0 0.0
      %1054 = vmatpush2.msra.mxu0 0.0
      %1055 = vmatprep.subr.mxu0 0.0
      %1056 = vmatpush2.msra.mxu0 0.0
      %1057 = vmatprep.subr.mxu0 0.0
      %1058 = vmatpush2.msra.mxu0 0.0
      %1059 = vmatprep.subr.mxu0 0.0
      %1060 = vmatpush2.msra.mxu0 0.0
      %1061 = vmatprep.subr.mxu0 0.0
      %1062 = vmatpush2.msra.mxu0 0.0
      %1063 = vmatprep.subr.mxu0 0.0
      %1064 = vmatpush2.msra.mxu0 0.0
      %1065 = vmatprep.subr.mxu0 0.0
      %1066 = vmatpush2.msra.mxu0 0.0
      %1067 = vmatprep.subr.mxu0 0.0
      %1068 = vmatpush2.msra.mxu0 0.0
      %1069 = vmatprep.subr.mxu0 0.0
      %1070 = vmatpush2.msra.mxu0 0.0
      %1071 = vmatprep.subr.mxu0 0.0
      %1072 = vmatpush2.msra.mxu0 0.0
      %1073 = vmatprep.subr.mxu0 0.0
      %1074 = vmatpush2.msra.mxu0 0.0
      %1075 = vmatprep.subr.mxu0 0.0
      %1076 = vmatpush2.msra.mxu0 0.0
      %1077 = vmatprep.subr.mxu0 0.0
      %1078 = vmatpush2.msra.mxu0 0.0
      %1079 = vmatprep.subr.mxu0 0.0
      %1080 = vmatpush2.msra.mxu0 0.0
      %1081 = vmatprep.mubr.f32.mxu0 0.0
      %1082 = vmatmul.mubr.f32.gmra.mxu0 %v994
      %v1083 = vpop.f32.mrf.mxu0
      %v1084 = vadd.f32 %v991, %v1083
      %v1085 = vpop.f32.mrf.mxu0
      %1086 = vmatprep.mubr.f32.mxu0 0.0
      %1087 = vmatmul.mubr.f32.gmra.mxu0 %v997
      %v1088 = vpop.f32.mrf.mxu0
      %v1089 = vadd.f32 %v991, %v1088
      %v1090 = vpop.f32.mrf.mxu0
      %1091 = vmatprep.mubr.f32.mxu0 0.0
      %1092 = vmatmul.mubr.f32.gmra.mxu0 %v1000
      %v1093 = vpop.f32.mrf.mxu0
      %v1094 = vadd.f32 %v991, %v1093
      %v1095 = vpop.f32.mrf.mxu0
      %1096 = vmatprep.mubr.f32.mxu0 0.0
      %1097 = vmatmul.mubr.f32.gmra.mxu0 %v1003
      %v1098 = vpop.f32.mrf.mxu0
      %v1099 = vadd.f32 %v991, %v1098
      %v1100 = vpop.f32.mrf.mxu0
      %1101 = vmatprep.mubr.f32.mxu0 0.0
      %1102 = vmatmul.mubr.f32.gmra.mxu0 %v1006
      %v1103 = vpop.f32.mrf.mxu0
      %v1104 = vadd.f32 %v991, %v1103
      %v1105 = vpop.f32.mrf.mxu0
      %1106 = vmatprep.mubr.f32.mxu0 0.0
      %1107 = vmatmul.mubr.f32.gmra.mxu0 %v1009
      %v1108 = vpop.f32.mrf.mxu0
      %v1109 = vadd.f32 %v991, %v1108
      %v1110 = vpop.f32.mrf.mxu0
      %1111 = vmatprep.mubr.f32.mxu0 0.0
      %1112 = vmatmul.mubr.f32.gmra.mxu0 %v1012
      %v1113 = vpop.f32.mrf.mxu0
      %v1114 = vadd.f32 %v991, %v1113
      %v1115 = vpop.f32.mrf.mxu0
      %1116 = vmatprep.mubr.f32.mxu0 0.0
      %1117 = vmatmul.mubr.f32.gmra.mxu0 %v1015
      %v1118 = vpop.f32.mrf.mxu0
      %v1119 = vadd.f32 %v991, %v1118
      %v1120 = vpop.f32.mrf.mxu0
      %1121 = vdwg.mxu0
      %vm1122 = vcmask 64512
      %1123 = vst.msk [vmem:[%s373] sm:$0xff] %vm1122, %v1084
      %1124 = vst.msk [vmem:[%s373 + $0x8] sm:$0xff] %vm1122, %v1089
      %1125 = vst.msk [vmem:[%s373 + $0x10] sm:$0xff] %vm1122, %v1094
      %1126 = vst.msk [vmem:[%s373 + $0x18] sm:$0xff] %vm1122, %v1099
      %1127 = vst.msk [vmem:[%s373 + $0x20] sm:$0xff] %vm1122, %v1104
      %1128 = vst.msk [vmem:[%s373 + $0x28] sm:$0xff] %vm1122, %v1109
      %1129 = vst.msk [vmem:[%s373 + $0x30] sm:$0xff] %vm1122, %v1114
      %1130 = vst.msk [vmem:[%s373 + $0x38] sm:$0xff] %vm1122, %v1119
      %s1131 = smul.u32 8, %s19
      %p1132 = scmp.lt.s32.totalorder %s1131, 15
      %s1133 = scalar_select %p1132, %s1131, 15
      %s1134 = smul.addr %s1133, 8
      %s1135 = scalar_lea.vmem %s8, %s1134
      // Predicated region
      $region53: #{gnn_inductive_node_head_jk.1} parent=51 // pred_check
        %p1136 = pneg %p225
      $region54: #{gnn_inductive_node_head_jk.1} parent=51 // pred_check_branch
        %1138 = sbr.rel (%p1136) target = $region56
      $region55: #{gnn_inductive_node_head_jk.1} parent=51 // pred_region
        %s1139 = smul.u32 8, %s19
      $region56: #{gnn_inductive_node_head_jk.1} parent=51 // pred_fallthru
        _
    $region52: #{gnn_inductive_node_head_jk.1} parent=5 // pred_fallthru
      _
    %p1140 = scmp.le.s32.totalorder 2, %s14
    // Predicated region
    $region57: #{gnn_inductive_node_head_jk.1} parent=5 // pred_check
      %p1141 = pneg %p1140
    $region58: #{gnn_inductive_node_head_jk.1} parent=5 // pred_check_branch
      %1143 = sbr.rel (%p1141) target = $region60
    $region59: #{gnn_inductive_node_head_jk.1} parent=5 // pred_region
      %s1144 = ssub.s32 %s14, 2
      // Predicated region
      $region61: #{gnn_inductive_node_head_jk.1} parent=59 // pred_check
        %p1145 = pneg %p231
      $region62: #{gnn_inductive_node_head_jk.1} parent=59 // pred_check_branch
        %1147 = sbr.rel (%p1145) target = $region64
      $region63: #{gnn_inductive_node_head_jk.1} parent=59 // pred_region
        %s1148 = smul.u32 8, %s20
        %p1149 = scmp.lt.s32.totalorder %s1148, 15
        %s1150 = scalar_select %p1149, %s1148, 15
        %s1151 = smul.addr %s1150, 8
        %s1152 = scalar_lea.vmem %s8, %s1151
      $region64: #{gnn_inductive_node_head_jk.1} parent=59 // pred_fallthru
        _
    $region60: #{gnn_inductive_node_head_jk.1} parent=5 // pred_fallthru
      _
  $region6: #{gnn_inductive_node_head_jk.1} parent=0 // loop_footer
    %s18 = sadd.s32 1, %s14
  $region7: #{gnn_inductive_node_head_jk.1} parent=0 // loop_footer_branch
    %13 = sbr.rel target = $region3
  $region8: #{gnn_inductive_node_head_jk.1} parent=0 // loop_exit
    _

</llo_original>
